<compile_context>
chip_gen: v7x
topology: tpu7x:2x2x1
jax: 0.10.0
libtpu: 0.0.40
codegen_flags: <defaults>
</compile_context>

<pallas_src>
import jax
import jax.numpy as jnp
import numpy as np
from jax.experimental import pallas as pl
from jax.experimental.pallas import tpu as pltpu


def _cdiv(a, b):
    return -(-a // b)


def _round_up(a, b):
    return _cdiv(a, b) * b


# --------------------------- gate kernel (tiny, M = B) ------------------------
_GATE_K_TILE_MAX = 2048


def _gate_k_tile(K):
    """K-tile for the pooled-feature matmul (K = C_in*16)."""
    return K if K <= _GATE_K_TILE_MAX else _GATE_K_TILE_MAX


def sle_gate_kernel(xp_ref, w1_ref, b1_ref, w2_ref, b2_ref, gate_ref, acc_ref):
    # xp_ref:   (B, tk)       pooled + flattened input tile (bf16)
    # w1_ref:   (tk, C_in)    4x4 conv as a matmul, K-tiled (bf16)
    # b1_ref:   (1, C_in)     f32
    # w2_ref:   (C_in, C_out) 1x1 conv as a matmul (bf16)
    # b2_ref:   (1, C_out)    f32
    # gate_ref: (B, C_out)    f32 output (resident across the K axis)
    # acc_ref:  (B, C_in)     f32 VMEM accumulator
    k = pl.program_id(0)

    @pl.when(k == 0)
    def _init():
        acc_ref[...] = jnp.zeros_like(acc_ref)

    acc_ref[...] += jnp.dot(xp_ref[...], w1_ref[...],
                            preferred_element_type=jnp.float32)

    @pl.when(k == pl.num_programs(0) - 1)
    def _finalize():
        z1 = acc_ref[...] + b1_ref[...]
        z1 = jnp.where(z1 >= 0, z1, 0.1 * z1)                 # LeakyReLU(0.1)
        z2 = jnp.dot(z1, w2_ref[...].astype(jnp.float32),
                     preferred_element_type=jnp.float32) + b2_ref[...]
        gate_ref[...] = jax.nn.sigmoid(z2)


# -------------------- broadcast-multiply kernel (hot path) --------------------
def sle_scale_kernel(gate_ref, sc_ref, o_ref):
    # gate_ref: (1, C_out, 1)    per-batch gate, column-broadcast along lanes
    # sc_ref:   (1, C_out, Ts)   shortcut tile, channels-first (spatial on lanes)
    # o_ref:    (1, C_out, Ts)
    o_ref[0] = (sc_ref[0] * gate_ref[0]).astype(o_ref.dtype)


# ------------------------------- helpers --------------------------------------
def _pick_spatial_tile(S, c_out, itemsize, batch,
                       budget_bytes=4 << 20, min_blocks=4):
    """Largest lane-dense (multiple-of-128) spatial tile within a per-block budget,
    capped so there are at least `min_blocks` grid blocks (keeps both v7x TCs busy)."""
    if S <= 128:
        return S
    tile = 128
    while (tile * 2 <= 16384
           and tile * 2 <= S
           and tile * 2 * c_out * itemsize <= budget_bytes):
        tile *= 2
    while tile > 128 and batch * _cdiv(S, tile) < min_blocks:
        tile //= 2
    return tile


def prepare_sle_params(w1, b1, w2, b2, param_dtype=jnp.bfloat16):
    """Reshape conv params into matmul-ready form (bf16 weights, f32 biases, K padded
    to the gate K-tile).  Call ONCE, outside the per-step path."""
    C_in = w1.shape[0]
    C_out = w2.shape[0]
    K = C_in * 16
    w1m = w1.reshape(C_in, K).T.astype(param_dtype)            # (K, C_in)
    tk = _gate_k_tile(K)
    Kp = _round_up(K, tk)
    if Kp != K:
        w1m = jnp.pad(w1m, ((0, Kp - K), (0, 0)))              # zero rows: no-op in the dot
    b1v = b1.reshape(1, C_in).astype(jnp.float32)
    w2m = w2.reshape(C_out, C_in).T.astype(param_dtype)        # (C_in, C_out)
    b2v = b2.reshape(1, C_out).astype(jnp.float32)
    return w1m, b1v, w2m, b2v


# ------------------------------- gate passes -----------------------------------
def _gate_pallas(xp, w1m, b1v, w2m, b2v):
    B, K = xp.shape
    Kp, C_in = w1m.shape
    C_out = w2m.shape[1]
    tk = _gate_k_tile(K)
    assert Kp == _round_up(K, tk)
    if Kp != K:
        xp = jnp.pad(xp, ((0, 0), (0, Kp - K)))
    xp = xp.astype(w1m.dtype)                                  # bf16 MXU-native operand

    itemsize = jnp.dtype(w1m.dtype).itemsize
    block_bytes = (B * tk + tk * C_in) * itemsize              # per-buffer streamed blocks
    resident = ((C_in * C_out + C_out) * itemsize              # w2, b2
                + C_in * 4 + B * C_in * 4 + B * C_out * 4)     # b1, acc, out
    vmem_limit = int(min(64 << 20, max(16 << 20, 2 * (2 * block_bytes + resident))))

    return pl.pallas_call(
        sle_gate_kernel,
        out_shape=jax.ShapeDtypeStruct((B, C_out), jnp.float32),
        grid_spec=pltpu.PrefetchScalarGridSpec(
            num_scalar_prefetch=0,
            grid=(Kp // tk,),
            in_specs=[
                pl.BlockSpec((B, tk), lambda k: (0, k)),
                pl.BlockSpec((tk, C_in), lambda k: (k, 0)),
                pl.BlockSpec((1, C_in), lambda k: (0, 0)),
                pl.BlockSpec((C_in, C_out), lambda k: (0, 0)),
                pl.BlockSpec((1, C_out), lambda k: (0, 0)),
            ],
            out_specs=pl.BlockSpec((B, C_out), lambda k: (0, 0)),
            scratch_shapes=[pltpu.VMEM((B, C_in), jnp.float32)],
        ),
        compiler_params=pltpu.CompilerParams(
            dimension_semantics=("arbitrary",),
            vmem_limit_bytes=vmem_limit,
        ),
    )(xp, w1m, b1v, w2m, b2v)


def _gate_jnp(xp, w1m, b1v, w2m, b2v):
    """Plain-jnp gate for tiny weights (skips one kernel dispatch)."""
    K = xp.shape[1]
    w1 = w1m[:K].astype(jnp.float32)
    z1 = jnp.dot(xp, w1, preferred_element_type=jnp.float32) + b1v
    z1 = jnp.where(z1 >= 0, z1, 0.1 * z1)
    z2 = jnp.dot(z1, w2m.astype(jnp.float32),
                 preferred_element_type=jnp.float32) + b2v
    return jax.nn.sigmoid(z2)


# ------------------------------- scale pass ------------------------------------
def _scale_pallas(gate3, sc_flat):
    B, C_out, S = sc_flat.shape
    out_dtype = sc_flat.dtype
    itemsize = jnp.dtype(out_dtype).itemsize
    tile_s = _pick_spatial_tile(S, C_out, itemsize, B)
    n_s = _cdiv(S, tile_s)                                     # ragged last tile is masked
    block_bytes = tile_s * C_out * itemsize
    gate_bytes = C_out * jnp.dtype(gate3.dtype).itemsize
    vmem_limit = int(min(64 << 20,
                         max(16 << 20, 2 * (2 * block_bytes + gate_bytes) + (1 << 20))))

    return pl.pallas_call(
        sle_scale_kernel,
        out_shape=jax.ShapeDtypeStruct((B, C_out, S), out_dtype),
        grid_spec=pltpu.PrefetchScalarGridSpec(
            num_scalar_prefetch=0,
            grid=(B, n_s),
            in_specs=[
                pl.BlockSpec((1, C_out, 1), lambda b, s: (b, 0, 0)),
                pl.BlockSpec((1, C_out, tile_s), lambda b, s: (b, 0, s)),
            ],
            out_specs=pl.BlockSpec((1, C_out, tile_s), lambda b, s: (b, 0, s)),
        ),
        compiler_params=pltpu.CompilerParams(
            dimension_semantics=("parallel", "parallel"),
            vmem_limit_bytes=vmem_limit,
        ),
    )(gate3, sc_flat)


# ------------------------------- wrapper ---------------------------------------
def sle_forward(x, shortcut, params, gate_impl="auto"):
    """x: (B, C_in, H, W) NCHW; shortcut: (B, C_out, Hs, Ws) NCHW. Returns NCHW, shortcut dtype."""
    w1m, b1v, w2m, b2v = params
    B, C_in, H, W = x.shape
    Bs, C_out, Hs, Ws = shortcut.shape
    assert B == Bs
    # TODO(synk): general AdaptiveAvgPool2d bin edges (H % 4 != 0 or W % 4 != 0) not implemented.
    assert H % 4 == 0 and W % 4 == 0

    # AdaptiveAvgPool2d((4,4)): cheap reduction; f32 accumulation without materializing an f32 x.
    pooled = jnp.mean(x.reshape(B, C_in, 4, H // 4, 4, W // 4), axis=(3, 5),
                      dtype=jnp.float32)
    xp = pooled.reshape(B, C_in * 16)

    # ---- pass 1: gate (B, C_out) ----
    if gate_impl == "auto":
        gate_impl = "pallas" if w1m.size * w1m.dtype.itemsize >= (1 << 20) else "jnp"
    if gate_impl == "pallas":
        gate = _gate_pallas(xp, w1m, b1v, w2m, b2v)
    else:
        gate = _gate_jnp(xp, w1m, b1v, w2m, b2v)

    if shortcut.dtype == jnp.bfloat16:
        gate = gate.astype(jnp.bfloat16)                       # keep hot multiply in bf16 vregs
    gate3 = gate.reshape(B, C_out, 1)

    # ---- pass 2: lane-dense broadcast multiply over the shortcut ----
    sc_flat = shortcut.reshape(B, C_out, Hs * Ws)              # free reshape (channels-first)
    out_flat = _scale_pallas(gate3, sc_flat)
    return out_flat.reshape(B, C_out, Hs, Ws)


# ------------------------ parameter setup (glue) ------------------------------
def spectral_normalize(w, key, n_iter=20):
    """Approximate torch spectral_norm: divide by largest singular value of w.reshape(out,-1)."""
    out_c = w.shape[0]
    w_mat = w.reshape(out_c, -1)
    u = jax.random.normal(key, (out_c,), dtype=w.dtype)
    u = u / (jnp.linalg.norm(u) + 1e-12)
    for _ in range(n_iter):
        v = w_mat.T @ u
        v = v / (jnp.linalg.norm(v) + 1e-12)
        u = w_mat @ v
        u = u / (jnp.linalg.norm(u) + 1e-12)
    sigma = u @ (w_mat @ v)
    return w / sigma


def make_params(key, in_channels, out_channels):
    k1, k2, k3, k4, k5, k6 = jax.random.split(key, 6)
    # sn_conv2d(in, in, kernel=4x4)
    w1 = 0.1 * jax.random.normal(k1, (in_channels, in_channels, 4, 4), jnp.float32)
    b1 = 0.1 * jax.random.normal(k2, (in_channels,), jnp.float32)
    # sn_conv2d(in, out, kernel=1x1)
    w2 = 0.1 * jax.random.normal(k3, (out_channels, in_channels, 1, 1), jnp.float32)
    b2 = 0.1 * jax.random.normal(k4, (out_channels,), jnp.float32)
    w1 = spectral_normalize(w1, k5)
    w2 = spectral_normalize(w2, k6)
    return w1, b1, w2, b2


# ------------------------ pure-JAX reference -----------------------------------
def sle_ref(x, shortcut, w1, b1, w2, b2):
    B, C_in, H, W = x.shape
    pooled = x.reshape(B, C_in, 4, H // 4, 4, W // 4).mean(axis=(3, 5))      # (B, C_in, 4, 4)
    z1 = jnp.einsum("bcij,ocij->bo", pooled, w1) + b1
    z1 = jnp.where(z1 >= 0, z1, 0.1 * z1)
    z2 = jnp.einsum("bc,oc->bo", z1, w2[:, :, 0, 0]) + b2
    gate = jax.nn.sigmoid(z2)
    return shortcut * gate[:, :, None, None]


if __name__ == "__main__":
    B, C_in, H, W = 2, 4, 16, 16
    C_out = 8

    key = jax.random.PRNGKey(0)
    kx, ks1, ks2, kp = jax.random.split(key, 4)
    x = jax.random.normal(kx, (B, C_in, H, W), jnp.float32)
    w1, b1, w2, b2 = make_params(kp, C_in, C_out)
    params = prepare_sle_params(w1, b1, w2, b2)   # hoisted out of the per-call path

    # Case 1: lane-friendly spatial extent; force the Pallas gate path (K-tiled kernel).
    sc1 = jax.random.normal(ks1, (B, C_out, 32, 32), jnp.float32)
    out1 = jax.block_until_ready(sle_forward(x, sc1, params, gate_impl="pallas"))
    ref1 = sle_ref(x, sc1, w1, b1, w2, b2)
    np.testing.assert_allclose(np.asarray(out1), np.asarray(ref1), rtol=2e-2, atol=2e-2)

    # Case 2: irregular spatial extent (S=400, masked last tile); auto gate (tiny -> jnp path).
    sc2 = jax.random.normal(ks2, (B, C_out, 20, 20), jnp.float32)
    out2 = jax.block_until_ready(sle_forward(x, sc2, params, gate_impl="auto"))
    ref2 = sle_ref(x, sc2, w1, b1, w2, b2)
    np.testing.assert_allclose(np.asarray(out2), np.asarray(ref2), rtol=2e-2, atol=2e-2)

    print("KERNEL_OK")
</pallas_src>

<mosaic_0001>
module attributes {stable_mosaic.version = 11 : i64} {
  func.func @sle_gate_kernel(%arg0: i32, %arg1: memref<2x64xbf16, #tpu.memory_space<vmem>>, %arg2: memref<64x4xbf16, #tpu.memory_space<vmem>>, %arg3: memref<1x4xf32, #tpu.memory_space<vmem>>, %arg4: memref<4x8xbf16, #tpu.memory_space<vmem>>, %arg5: memref<1x8xf32, #tpu.memory_space<vmem>>, %arg6: memref<2x8xf32, #tpu.memory_space<vmem>>, %arg7: memref<2x4xf32, #tpu.memory_space<vmem>>) attributes {dimension_semantics = [#tpu.dimension_semantics<arbitrary>], iteration_bounds = array<i64: 1>, scalar_prefetch = 0 : i64, scratch_operands = 1 : i64, tpu.core_type = #tpu.core_type<tc>, window_params = [{transform_indices = @transform_0, window_bounds = array<i64: 2, 64>}, {transform_indices = @transform_1, window_bounds = array<i64: 64, 4>}, {pipeline_mode = #tpu.pipeline_mode<synchronous>, transform_indices = @transform_2, window_bounds = array<i64: 1, 4>}, {pipeline_mode = #tpu.pipeline_mode<synchronous>, transform_indices = @transform_3, window_bounds = array<i64: 4, 8>}, {pipeline_mode = #tpu.pipeline_mode<synchronous>, transform_indices = @transform_4, window_bounds = array<i64: 1, 8>}, {pipeline_mode = #tpu.pipeline_mode<synchronous>, transform_indices = @transform_5, window_bounds = array<i64: 2, 8>}]} {
    %c0_i32 = arith.constant 0 : i32
    %0 = arith.cmpi eq, %arg0, %c0_i32 : i32
    %1 = arith.extui %0 : i1 to i32
    %c0_i32_0 = arith.constant 0 : i32
    %2 = arith.cmpi ne, %1, %c0_i32_0 : i32
    scf.if %2 {
      %cst_10 = arith.constant 0.000000e+00 : f32
      %12 = vector.broadcast %cst_10 : f32 to vector<2x4xf32>
      %c0_11 = arith.constant 0 : index
      %c0_12 = arith.constant 0 : index
      %13 = vector.load %arg7[%c0_11, %c0_12] : memref<2x4xf32, #tpu.memory_space<vmem>>, vector<2x4xf32>
      tpu.vector_store %arg7[%c0_11, %c0_12], %12 {strides = array<i32>} : memref<2x4xf32, #tpu.memory_space<vmem>>, vector<2x4xf32>,
    } else {
    }
    %c0 = arith.constant 0 : index
    %c0_1 = arith.constant 0 : index
    %3 = vector.load %arg7[%c0, %c0_1] : memref<2x4xf32, #tpu.memory_space<vmem>>, vector<2x4xf32>
    %c0_2 = arith.constant 0 : index
    %c0_3 = arith.constant 0 : index
    %4 = vector.load %arg1[%c0_2, %c0_3] : memref<2x64xbf16, #tpu.memory_space<vmem>>, vector<2x64xbf16>
    %c0_4 = arith.constant 0 : index
    %c0_5 = arith.constant 0 : index
    %5 = vector.load %arg2[%c0_4, %c0_5] : memref<64x4xbf16, #tpu.memory_space<vmem>>, vector<64x4xbf16>
    %cst = arith.constant dense<0.000000e+00> : vector<2x4xf32>
    %6 = tpu.matmul %4, %5, %cst {dimension_numbers = #tpu.dot_dimension_numbers<[1], [0], [0], [1], [0, 0, 1, 1], [], []>} : vector<2x64xbf16>, vector<64x4xbf16>, vector<2x4xf32> -> vector<2x4xf32>
    %7 = arith.addf %3, %6 : vector<2x4xf32>
    %c0_6 = arith.constant 0 : index
    %c0_7 = arith.constant 0 : index
    %8 = vector.load %arg7[%c0_6, %c0_7] : memref<2x4xf32, #tpu.memory_space<vmem>>, vector<2x4xf32>
    tpu.vector_store %arg7[%c0_6, %c0_7], %7 {strides = array<i32>} : memref<2x4xf32, #tpu.memory_space<vmem>>, vector<2x4xf32>,
    %c0_i32_8 = arith.constant 0 : i32
    %9 = arith.cmpi eq, %arg0, %c0_i32_8 : i32
    %10 = arith.extui %9 : i1 to i32
    %c0_i32_9 = arith.constant 0 : i32
    %11 = arith.cmpi ne, %10, %c0_i32_9 : i32
    scf.if %11 {
      %c0_10 = arith.constant 0 : index
      %c0_11 = arith.constant 0 : index
      %12 = vector.load %arg7[%c0_10, %c0_11] : memref<2x4xf32, #tpu.memory_space<vmem>>, vector<2x4xf32>
      %c0_12 = arith.constant 0 : index
      %c0_13 = arith.constant 0 : index
      %13 = vector.load %arg3[%c0_12, %c0_13] : memref<1x4xf32, #tpu.memory_space<vmem>>, vector<1x4xf32>
      %14 = vector.broadcast %13 : vector<1x4xf32> to vector<2x4xf32>
      %15 = arith.addf %12, %14 : vector<2x4xf32>
      %cst_14 = arith.constant 0.000000e+00 : f32
      %16 = vector.broadcast %cst_14 : f32 to vector<2x4xf32>
      %17 = arith.cmpf oge, %15, %16 : vector<2x4xf32>
      %cst_15 = arith.constant 1.000000e-01 : f32
      %18 = vector.broadcast %cst_15 : f32 to vector<2x4xf32>
      %19 = arith.mulf %18, %15 : vector<2x4xf32>
      %20 = arith.select %17, %15, %19 : vector<2x4xi1>, vector<2x4xf32>
      %c0_16 = arith.constant 0 : index
      %c0_17 = arith.constant 0 : index
      %21 = vector.load %arg4[%c0_16, %c0_17] : memref<4x8xbf16, #tpu.memory_space<vmem>>, vector<4x8xbf16>
      %22 = arith.extf %21 : vector<4x8xbf16> to vector<4x8xf32>
      %cst_18 = arith.constant dense<0.000000e+00> : vector<2x8xf32>
      %23 = tpu.matmul %20, %22, %cst_18 {dimension_numbers = #tpu.dot_dimension_numbers<[1], [0], [0], [1], [0, 0, 1, 1], [], []>} : vector<2x4xf32>, vector<4x8xf32>, vector<2x8xf32> -> vector<2x8xf32>
      %c0_19 = arith.constant 0 : index
      %c0_20 = arith.constant 0 : index
      %24 = vector.load %arg5[%c0_19, %c0_20] : memref<1x8xf32, #tpu.memory_space<vmem>>, vector<1x8xf32>
      %25 = vector.broadcast %24 : vector<1x8xf32> to vector<2x8xf32>
      %26 = arith.addf %23, %25 : vector<2x8xf32>
      %27 = arith.negf %26 : vector<2x8xf32>
      %28 = math.exp %27 : vector<2x8xf32>
      %cst_21 = arith.constant 1.000000e+00 : f32
      %29 = vector.broadcast %cst_21 : f32 to vector<2x8xf32>
      %30 = arith.addf %29, %28 : vector<2x8xf32>
      %31 = arith.divf %29, %30 : vector<2x8xf32>
      %c0_22 = arith.constant 0 : index
      %c0_23 = arith.constant 0 : index
      %32 = vector.load %arg6[%c0_22, %c0_23] : memref<2x8xf32, #tpu.memory_space<vmem>>, vector<2x8xf32>
      tpu.vector_store %arg6[%c0_22, %c0_23], %31 {strides = array<i32>} : memref<2x8xf32, #tpu.memory_space<vmem>>, vector<2x8xf32>,
    } else {
    }
    return
  }
  func.func @transform_0(%arg0: i32) -> (i32, i32) {
    %c0_i32 = arith.constant 0 : i32
    %c0_i32_0 = arith.constant 0 : i32
    return %c0_i32, %arg0 : i32, i32
  }
  func.func @transform_1(%arg0: i32) -> (i32, i32) {
    %c0_i32 = arith.constant 0 : i32
    %c0_i32_0 = arith.constant 0 : i32
    return %arg0, %c0_i32 : i32, i32
  }
  func.func @transform_2(%arg0: i32) -> (i32, i32) {
    %c0_i32 = arith.constant 0 : i32
    %c0_i32_0 = arith.constant 0 : i32
    %c0_i32_1 = arith.constant 0 : i32
    return %c0_i32, %c0_i32_0 : i32, i32
  }
  func.func @transform_3(%arg0: i32) -> (i32, i32) {
    %c0_i32 = arith.constant 0 : i32
    %c0_i32_0 = arith.constant 0 : i32
    %c0_i32_1 = arith.constant 0 : i32
    return %c0_i32, %c0_i32_0 : i32, i32
  }
  func.func @transform_4(%arg0: i32) -> (i32, i32) {
    %c0_i32 = arith.constant 0 : i32
    %c0_i32_0 = arith.constant 0 : i32
    %c0_i32_1 = arith.constant 0 : i32
    return %c0_i32, %c0_i32_0 : i32, i32
  }
  func.func @transform_5(%arg0: i32) -> (i32, i32) {
    %c0_i32 = arith.constant 0 : i32
    %c0_i32_0 = arith.constant 0 : i32
    %c0_i32_1 = arith.constant 0 : i32
    return %c0_i32, %c0_i32_0 : i32, i32
  }
}

</mosaic_0001>

<llo_original>
// kernel: tpu_custom_call.1
$region0: #{tpu_custom_call.1}
  #allocation0 [shape = 'u32[]', space=smem, size = 0x4, offset = 0x4, fixed_abs, tag = 'smem constant byte address 0x4 - core index']
  #allocation1 [shape = 'u32[144,128]{1,0:T(1,128)}', space=vmem, size = 0x12000, scoped, tag = 'internal scratch']
  #allocation2 [shape = 'f32[2,4]{1,0:T(2,128)}', space=vmem, size = 0x400, scoped, tag = 'scratch operand']
  %s0 = inlined_call_operand.vmem [shape: bf16[2,64], index: 0, kind: input, shape index: {}]
  %s1 = inlined_call_operand.vmem [shape: bf16[64,4], index: 1, kind: input, shape index: {}]
  %s2 = inlined_call_operand.vmem [shape: f32[1,4], index: 2, kind: input, shape index: {}]
  %s3 = inlined_call_operand.vmem [shape: bf16[4,8], index: 3, kind: input, shape index: {}]
  %s4 = inlined_call_operand.vmem [shape: f32[1,8], index: 4, kind: input, shape index: {}]
  %s5 = inlined_call_operand.hbm [shape: f32[2,8], index: 5, kind: output, shape index: {}]
  %s6 = sld [smem:[#allocation0]]
  $region38: #{tpu_custom_call.1} parent=0
    _
  %s8 = ssub.s32 1, %s6
  %s9 = scalar_select 0, %s8, %s6
  $region1: #{tpu_custom_call.1} parent=0
    #allocation3 [shape = 'u8[1024]{0}', space=vmem, size = 0x400, scoped, tag = 'output window, operand 0, single buffered']
    #allocation4 [shape = 's32[1]{0}', space=sflag, size = 0x4, scoped, tag = 'scoped memory for tpu_custom_call.1']
    %10 = vsyncpa [#allocation4], 0
    // Predicated region
    $region2: #{tpu_custom_call.1} parent=1 // pred_check
      _
    $region3: #{tpu_custom_call.1} parent=1 // pred_check_branch
      %12 = sbr.rel (0) target = $region5
    $region4: #{tpu_custom_call.1} parent=1 // pred_region
      _
    $region5: #{tpu_custom_call.1} parent=1 // pred_fallthru
      _
    // Predicated region
    $region6: #{tpu_custom_call.1} parent=1 // pred_check
      _
    $region7: #{tpu_custom_call.1} parent=1 // pred_check_branch
      %14 = sbr.rel (0) target = $region9
    $region8: #{tpu_custom_call.1} parent=1 // pred_region
      _
    $region9: #{tpu_custom_call.1} parent=1 // pred_fallthru
      _
    // Predicated region
    $region10: #{tpu_custom_call.1} parent=1 // pred_check
      _
    $region11: #{tpu_custom_call.1} parent=1 // pred_check_branch
      %16 = sbr.rel (0) target = $region13
    $region12: #{tpu_custom_call.1} parent=1 // pred_region
      _
    $region13: #{tpu_custom_call.1} parent=1 // pred_fallthru
      _
    // Predicated region
    $region14: #{tpu_custom_call.1} parent=1 // pred_check
      _
    $region15: #{tpu_custom_call.1} parent=1 // pred_check_branch
      %18 = sbr.rel (0) target = $region17
    $region16: #{tpu_custom_call.1} parent=1 // pred_region
      _
    $region17: #{tpu_custom_call.1} parent=1 // pred_fallthru
      _
    // Predicated region
    $region18: #{tpu_custom_call.1} parent=1 // pred_check
      _
    $region19: #{tpu_custom_call.1} parent=1 // pred_check_branch
      %20 = sbr.rel (0) target = $region21
    $region20: #{tpu_custom_call.1} parent=1 // pred_region
      _
    $region21: #{tpu_custom_call.1} parent=1 // pred_fallthru
      _
    %p22 = scmp.eq.s32.totalorder 0, 0
    // Predicated region
    $region22: #{tpu_custom_call.1} parent=1 // pred_check
      %p23 = pneg %p22
    $region23: #{tpu_custom_call.1} parent=1 // pred_check_branch
      %25 = sbr.rel (%p23) target = $region25
    $region24: #{tpu_custom_call.1} parent=1 // pred_region
      %vm26 = vcmask 25600
      %27 = vst.msk [vmem:[#allocation2] sm:$0x3] %vm26, 0.0
    $region25: #{tpu_custom_call.1} parent=1 // pred_fallthru
      _
    %v28 = vld [vmem:[#allocation2] sm:$0x3]
    %v29 = vld [vmem:[%s0] sm:$0x1]
    %v30 = vld [vmem:[%s1] sm:$0xf]
    %v31 = vld [vmem:[%s1 + $0x4] sm:$0xf]
    %v32 = vld [vmem:[%s1 + $0x8] sm:$0xf]
    %v33 = vld [vmem:[%s1 + $0xc] sm:$0xf]
    %v34 = vld [vmem:[%s1 + $0x10] sm:$0xf]
    %v35 = vld [vmem:[%s1 + $0x14] sm:$0xf]
    %v36 = vld [vmem:[%s1 + $0x18] sm:$0xf]
    %v37 = vld [vmem:[%s1 + $0x1c] sm:$0xf]
    %v46 = vunpack.c.l.b16 %v30
    %v47 = vunpack.c.l.b16 %v31
    %v48 = vunpack.c.l.b16 %v32
    %v49 = vunpack.c.l.b16 %v33
    %v50 = vunpack.c.l.b16 %v34
    %v51 = vunpack.c.l.b16 %v35
    %v52 = vunpack.c.l.b16 %v36
    %v53 = vunpack.c.l.b16 %v37
    %v54 = vpack.c.b16 %v47, %v46
    %v55 = vpack.c.b16 %v49, %v48
    %v56 = vpack.c.b16 %v51, %v50
    %v57 = vpack.c.b16 %v53, %v52
    %vm62 = vcmask 523264
    %v64 = vsel %vm62, %v29, 0
    %66 = vmatprep.subr.bf16.mxu0 0
    %67 = vmatpush1.bf16.msra.mxu0 %v54
    %68 = vmatprep.subr.bf16.mxu0 0
    %69 = vmatpush1.bf16.msra.mxu0 %v55
    %70 = vmatprep.subr.bf16.mxu0 0
    %71 = vmatpush1.bf16.msra.mxu0 %v56
    %72 = vmatprep.subr.bf16.mxu0 0
    %73 = vmatpush1.bf16.msra.mxu0 %v57
    %74 = vmatprep.subr.bf16.mxu0 0
    %75 = vmatpush1.bf16.msra.mxu0 0
    %76 = vmatprep.subr.bf16.mxu0 0
    %77 = vmatpush1.bf16.msra.mxu0 0
    %78 = vmatprep.subr.bf16.mxu0 0
    %79 = vmatpush1.bf16.msra.mxu0 0
    %80 = vmatprep.subr.bf16.mxu0 0
    %81 = vmatpush1.bf16.msra.mxu0 0
    %82 = vmatprep.subr.bf16.mxu0 0
    %83 = vmatpush1.bf16.msra.mxu0 0
    %84 = vmatprep.subr.bf16.mxu0 0
    %85 = vmatpush1.bf16.msra.mxu0 0
    %86 = vmatprep.subr.bf16.mxu0 0
    %87 = vmatpush1.bf16.msra.mxu0 0
    %88 = vmatprep.subr.bf16.mxu0 0
    %89 = vmatpush1.bf16.msra.mxu0 0
    %90 = vmatprep.subr.bf16.mxu0 0
    %91 = vmatpush1.bf16.msra.mxu0 0
    %92 = vmatprep.subr.bf16.mxu0 0
    %93 = vmatpush1.bf16.msra.mxu0 0
    %94 = vmatprep.subr.bf16.mxu0 0
    %95 = vmatpush1.bf16.msra.mxu0 0
    %96 = vmatprep.subr.bf16.mxu0 0
    %97 = vmatpush1.bf16.msra.mxu0 0
    %98 = vmatprep.mubr.bf16.mxu0 0
    %99 = vmatmul.mubr.bf16.gmra.mrb[0].mxu0 %v64
    %v100 = vpop.f32.mrb[0].mxu0
    %v101 = vadd.f32 0.0, %v100
    %v102 = vpop.f32.mrb[0].mxu0
    %v103 = vpop.f32.mrb[0].mxu0
    %v104 = vpop.f32.mrb[0].mxu0
    %105 = vdwg.mxu0
    %v106 = vadd.f32 %v28, %v101
    %vm107 = vcmask 25600
    %108 = vst.msk [vmem:[#allocation2] sm:$0x3] %vm107, %v106
    // Predicated region
    $region26: #{tpu_custom_call.1} parent=1 // pred_check
      %p109 = pneg %p22
    $region27: #{tpu_custom_call.1} parent=1 // pred_check_branch
      %111 = sbr.rel (%p109) target = $region29
    $region28: #{tpu_custom_call.1} parent=1 // pred_region
      %v112 = vld [vmem:[#allocation2] sm:$0x3]
      %v113 = vld [vmem:[%s2] sm:$0x1]
      %v115 = vlaneseq
      %v116 = vshrl.u32 %v115, 7
      %v117 = vsub.s32 0, %v116
      %v118 = vrot.slane %v113, %v117
      %v120 = vadd.f32 %v112, %v118
      %vm121 = vcmp.ge.f32.partialorder %v120, 0.0
      %v122 = vmul.f32 %v120, 0.1
      %v123 = vsel %vm121, %v120, %v122
      %v124 = vld [vmem:[%s3] sm:$0x3]
      %v125 = vunpack.c.l.bf16 %v124
      %v126 = vld [vmem:[%s4] sm:$0x1]
      %v128 = vlaneseq
      %v129 = vshrl.u32 %v128, 7
      %v130 = vsub.s32 0, %v129
      %v131 = vrot.slane %v126, %v130
      %vm133 = vcmask 31744
      %v135 = vsel %vm133, %v123, 0
      %vm137 = vcmask 1043456
      %v139 = vsel %vm137, %v125, 0
      %141 = vmatprep.subr.mxu0 0.0
      %142 = vmatpush1.msra.mxu0 %v139
      %143 = vmatprep.subr.mxu0 0.0
      %144 = vmatpush1.msra.mxu0 0.0
      %145 = vmatprep.subr.mxu0 0.0
      %146 = vmatpush1.msra.mxu0 0.0
      %147 = vmatprep.subr.mxu0 0.0
      %148 = vmatpush1.msra.mxu0 0.0
      %149 = vmatprep.subr.mxu0 0.0
      %150 = vmatpush1.msra.mxu0 0.0
      %151 = vmatprep.subr.mxu0 0.0
      %152 = vmatpush1.msra.mxu0 0.0
      %153 = vmatprep.subr.mxu0 0.0
      %154 = vmatpush1.msra.mxu0 0.0
      %155 = vmatprep.subr.mxu0 0.0
      %156 = vmatpush1.msra.mxu0 0.0
      %157 = vmatprep.subr.mxu0 0.0
      %158 = vmatpush1.msra.mxu0 0.0
      %159 = vmatprep.subr.mxu0 0.0
      %160 = vmatpush1.msra.mxu0 0.0
      %161 = vmatprep.subr.mxu0 0.0
      %162 = vmatpush1.msra.mxu0 0.0
      %163 = vmatprep.subr.mxu0 0.0
      %164 = vmatpush1.msra.mxu0 0.0
      %165 = vmatprep.subr.mxu0 0.0
      %166 = vmatpush1.msra.mxu0 0.0
      %167 = vmatprep.subr.mxu0 0.0
      %168 = vmatpush1.msra.mxu0 0.0
      %169 = vmatprep.subr.mxu0 0.0
      %170 = vmatpush1.msra.mxu0 0.0
      %171 = vmatprep.subr.mxu0 0.0
      %172 = vmatpush1.msra.mxu0 0.0
      %173 = vmatprep.subr.mxu0 0.0
      %174 = vmatpush1.msra.mxu0 0.0
      %175 = vmatprep.subr.mxu0 0.0
      %176 = vmatpush1.msra.mxu0 0.0
      %177 = vmatprep.subr.mxu0 0.0
      %178 = vmatpush1.msra.mxu0 0.0
      %179 = vmatprep.subr.mxu0 0.0
      %180 = vmatpush1.msra.mxu0 0.0
      %181 = vmatprep.subr.mxu0 0.0
      %182 = vmatpush1.msra.mxu0 0.0
      %183 = vmatprep.subr.mxu0 0.0
      %184 = vmatpush1.msra.mxu0 0.0
      %185 = vmatprep.subr.mxu0 0.0
      %186 = vmatpush1.msra.mxu0 0.0
      %187 = vmatprep.subr.mxu0 0.0
      %188 = vmatpush1.msra.mxu0 0.0
      %189 = vmatprep.subr.mxu0 0.0
      %190 = vmatpush1.msra.mxu0 0.0
      %191 = vmatprep.subr.mxu0 0.0
      %192 = vmatpush1.msra.mxu0 0.0
      %193 = vmatprep.subr.mxu0 0.0
      %194 = vmatpush1.msra.mxu0 0.0
      %195 = vmatprep.subr.mxu0 0.0
      %196 = vmatpush1.msra.mxu0 0.0
      %197 = vmatprep.subr.mxu0 0.0
      %198 = vmatpush1.msra.mxu0 0.0
      %199 = vmatprep.subr.mxu0 0.0
      %200 = vmatpush1.msra.mxu0 0.0
      %201 = vmatprep.subr.mxu0 0.0
      %202 = vmatpush1.msra.mxu0 0.0
      %203 = vmatprep.subr.mxu0 0.0
      %204 = vmatpush1.msra.mxu0 0.0
      %205 = vmatprep.mubr.f32.mxu0 0.0
      %206 = vmatmul.mubr.f32.gmra.mrb[0].mxu0 %v135
      %v207 = vpop.f32.mrb[0].mxu0
      %v208 = vadd.f32 %v131, %v207
      %v209 = vpop.f32.mrb[0].mxu0
      %210 = vdwg.mxu0
      %v211 = vxor.u32 %v208, 2147483648
      %v212 = vmul.f32 %v211, 1.442695
      %v213 = vpow.pop %v212
      %v214 = vadd.f32 %v213, 1.0
      %v215 = vrcp.pop %v214
      %v216 = vmul.f32 1.0, %v215
      %vm217 = vcmask 58368
      %218 = vst.msk [vmem:[#allocation3] sm:$0x3] %vm217, %v216
    $region29: #{tpu_custom_call.1} parent=1 // pred_fallthru
      _
    // Predicated region
    $region30: #{tpu_custom_call.1} parent=1 // pred_check
      _
    $region31: #{tpu_custom_call.1} parent=1 // pred_check_branch
      %220 = sbr.rel (0) target = $region33
    $region32: #{tpu_custom_call.1} parent=1 // pred_region
      %s222 = ssub.s32 32, 32
      %223 = vsyncadd [#allocation4], %s222
      %s225 = sshll.u32 [#allocation3], 4
      %s226 = int_to_ptr.vmem [resolvable:$true] %s225
      %228 = dma.vmem_to_hbm [thread:$0]  %s226, 32, %s5, [#allocation4]
    $region33: #{tpu_custom_call.1} parent=1 // pred_fallthru
      _
    // Predicated region
    $region34: #{tpu_custom_call.1} parent=1 // pred_check
      _
    $region35: #{tpu_custom_call.1} parent=1 // pred_check_branch
      %230 = sbr.rel (0) target = $region37
    $region36: #{tpu_custom_call.1} parent=1 // pred_region
      %231 = dma.done [#allocation4], 32
    $region37: #{tpu_custom_call.1} parent=1 // pred_fallthru
      _
    %232 = vsyncpa [#allocation4], 1

</llo_original>
